<compile_context>
chip_gen: v5e
topology: v5e:2x2
jax: 0.10.0
libtpu: 0.0.40
codegen_flags: <defaults>
</compile_context>

<pallas_src>
import jax
import jax.numpy as jnp
from jax.experimental import pallas as pl
from jax.experimental.pallas import tpu as pltpu

INPUT_SIZE = 50
HIDDEN_SIZE = 120
ENCODING_SIZE = 110
FEAT = 128          # padded feature width (50/110/120 all fit in one 128-lane vreg)
DEFAULT_TB = 512    # batch tile (multiple of 256 -> good MXU M on v6e/v7x, 128 ok on v5e)


def _round_up(x, m):
    return (x + m - 1) // m * m


def autoencoder_kernel(x_ref,
                       w1_ref, b1_ref,
                       w2_ref, b2_ref,
                       w3_ref, b3_ref,
                       w4_ref, b4_ref,
                       o_ref):
    # x_ref: (TB, 128) bf16, weights: (128, 128) bf16, biases: (1, 128) f32.
    def layer(h_bf16, w_ref, b_ref):
        acc = jnp.dot(h_bf16, w_ref[...], preferred_element_type=jnp.float32)
        return jnp.maximum(acc + b_ref[...], 0.0)          # bias + ReLU in f32

    a1 = layer(x_ref[...], w1_ref, b1_ref)                  # in -> hidden
    a2 = layer(a1.astype(jnp.bfloat16), w2_ref, b2_ref)      # hidden -> encoding
    a3 = layer(a2.astype(jnp.bfloat16), w3_ref, b3_ref)      # encoding -> hidden
    a4 = layer(a3.astype(jnp.bfloat16), w4_ref, b4_ref)      # hidden -> in
    o_ref[...] = a4                                          # f32, lane-dense 128 wide


def autoencoder_forward(x, params_padded, tb=DEFAULT_TB):
    """x: (B, INPUT_SIZE) float32.
    params_padded: list of 4 (w_bf16 (128,128), b_f32 (1,128)) padded tensors."""
    B = x.shape[0]

    # Batch tile: at least 8 rows (sublane granularity), at most `tb`.
    tb_eff = min(tb, _round_up(B, 8))
    b_pad = _round_up(B, tb_eff)

    # Pad input to (b_pad, 128) and cast to bf16 (MXU operand dtype).
    x_p = jnp.zeros((b_pad, FEAT), jnp.float32).at[:B, :INPUT_SIZE].set(x)
    x_p = x_p.astype(jnp.bfloat16)

    flat = [x_p]
    for w, b in params_padded:
        flat += [w, b]

    grid = (b_pad // tb_eff,)

    act_spec = pl.BlockSpec((tb_eff, FEAT), lambda i: (i, 0))       # streamed per tile
    w_spec = pl.BlockSpec((FEAT, FEAT), lambda i: (0, 0))           # resident in VMEM
    b_spec = pl.BlockSpec((1, FEAT), lambda i: (0, 0))              # resident in VMEM
    in_specs = [act_spec, w_spec, b_spec, w_spec, b_spec, w_spec, b_spec, w_spec, b_spec]
    out_spec = pl.BlockSpec((tb_eff, FEAT), lambda i: (i, 0))

    flops = 2 * B * (INPUT_SIZE * HIDDEN_SIZE + HIDDEN_SIZE * ENCODING_SIZE
                     + ENCODING_SIZE * HIDDEN_SIZE + HIDDEN_SIZE * INPUT_SIZE)
    bytes_accessed = (x_p.size * 2 + b_pad * FEAT * 4
                      + sum(w.size * 2 + b.size * 4 for w, b in params_padded))

    out_padded = pl.pallas_call(
        autoencoder_kernel,
        out_shape=jax.ShapeDtypeStruct((b_pad, FEAT), jnp.float32),
        grid=grid,
        in_specs=in_specs,
        out_specs=out_spec,
        compiler_params=pltpu.CompilerParams(
            dimension_semantics=("parallel",),
            vmem_limit_bytes=32 << 20,
        ),
        cost_estimate=pl.CostEstimate(
            flops=flops, transcendentals=0, bytes_accessed=bytes_accessed),
    )(*flat)

    return out_padded[:B, :INPUT_SIZE]


def init_params(key):
    """PyTorch-Linear-style init (uniform(-1/sqrt(fan_in), +1/sqrt(fan_in))).
    Returns padded params: weights (128, 128) bf16 (pre-transposed to (in, out),
    zero-padded), biases (1, 128) f32 (zero-padded)."""
    dims = [(INPUT_SIZE, HIDDEN_SIZE),
            (HIDDEN_SIZE, ENCODING_SIZE),
            (ENCODING_SIZE, HIDDEN_SIZE),
            (HIDDEN_SIZE, INPUT_SIZE)]
    params = []
    for (fan_in, fan_out) in dims:
        key, kw, kb = jax.random.split(key, 3)
        bound = 1.0 / jnp.sqrt(fan_in)
        w = jax.random.uniform(kw, (fan_in, fan_out), jnp.float32, -bound, bound)
        b = jax.random.uniform(kb, (1, fan_out), jnp.float32, -bound, bound)
        w_p = jnp.zeros((FEAT, FEAT), jnp.float32).at[:fan_in, :fan_out].set(w)
        b_p = jnp.zeros((1, FEAT), jnp.float32).at[:, :fan_out].set(b)
        params.append((w_p.astype(jnp.bfloat16), b_p))
    return params


def reference_forward(x, params_padded):
    """Pure-JAX reference mirroring the kernel numerics (bf16 operands, f32 accum)."""
    B = x.shape[0]
    h = jnp.zeros((B, FEAT), jnp.float32).at[:, :INPUT_SIZE].set(x).astype(jnp.bfloat16)
    for w, b in params_padded:
        acc = jnp.dot(h, w, preferred_element_type=jnp.float32)
        a = jnp.maximum(acc + b, 0.0)
        h = a.astype(jnp.bfloat16)
    return a[:, :INPUT_SIZE]


if __name__ == "__main__":
    key = jax.random.PRNGKey(0)
    key, kx = jax.random.split(key)
    batch = 8
    x = jax.random.normal(kx, (batch, INPUT_SIZE), jnp.float32)
    params = init_params(key)

    out = autoencoder_forward(x, params)
    out = jax.block_until_ready(out)

    ref = reference_forward(x, params)
    assert out.shape == (batch, INPUT_SIZE)
    assert jnp.allclose(out, ref, atol=1e-3, rtol=1e-3), "mismatch vs pure-JAX reference"

    print("KERNEL_OK")
</pallas_src>

<mosaic_0001>
module attributes {stable_mosaic.version = 11 : i64} {
  func.func @autoencoder_kernel(%arg0: i32, %arg1: memref<8x128xbf16, #tpu.memory_space<vmem>>, %arg2: memref<128x128xbf16, #tpu.memory_space<vmem>>, %arg3: memref<1x128xf32, #tpu.memory_space<vmem>>, %arg4: memref<128x128xbf16, #tpu.memory_space<vmem>>, %arg5: memref<1x128xf32, #tpu.memory_space<vmem>>, %arg6: memref<128x128xbf16, #tpu.memory_space<vmem>>, %arg7: memref<1x128xf32, #tpu.memory_space<vmem>>, %arg8: memref<128x128xbf16, #tpu.memory_space<vmem>>, %arg9: memref<1x128xf32, #tpu.memory_space<vmem>>, %arg10: memref<8x128xf32, #tpu.memory_space<vmem>>) attributes {dimension_semantics = [#tpu.dimension_semantics<parallel>], iteration_bounds = array<i64: 1>, scalar_prefetch = 0 : i64, scratch_operands = 0 : i64, tpu.core_type = #tpu.core_type<tc>, window_params = [{transform_indices = @transform_0, window_bounds = array<i64: 8, 128>}, {pipeline_mode = #tpu.pipeline_mode<synchronous>, transform_indices = @transform_1, window_bounds = array<i64: 128, 128>}, {pipeline_mode = #tpu.pipeline_mode<synchronous>, transform_indices = @transform_2, window_bounds = array<i64: 1, 128>}, {pipeline_mode = #tpu.pipeline_mode<synchronous>, transform_indices = @transform_3, window_bounds = array<i64: 128, 128>}, {pipeline_mode = #tpu.pipeline_mode<synchronous>, transform_indices = @transform_4, window_bounds = array<i64: 1, 128>}, {pipeline_mode = #tpu.pipeline_mode<synchronous>, transform_indices = @transform_5, window_bounds = array<i64: 128, 128>}, {pipeline_mode = #tpu.pipeline_mode<synchronous>, transform_indices = @transform_6, window_bounds = array<i64: 1, 128>}, {pipeline_mode = #tpu.pipeline_mode<synchronous>, transform_indices = @transform_7, window_bounds = array<i64: 128, 128>}, {pipeline_mode = #tpu.pipeline_mode<synchronous>, transform_indices = @transform_8, window_bounds = array<i64: 1, 128>}, {transform_indices = @transform_9, window_bounds = array<i64: 8, 128>}]} {
    %c0 = arith.constant 0 : index
    %c0_0 = arith.constant 0 : index
    %0 = vector.load %arg1[%c0, %c0_0] : memref<8x128xbf16, #tpu.memory_space<vmem>>, vector<8x128xbf16>
    %c0_1 = arith.constant 0 : index
    %c0_2 = arith.constant 0 : index
    %1 = vector.load %arg2[%c0_1, %c0_2] : memref<128x128xbf16, #tpu.memory_space<vmem>>, vector<128x128xbf16>
    %cst = arith.constant dense<0.000000e+00> : vector<8x128xf32>
    %2 = tpu.matmul %0, %1, %cst {dimension_numbers = #tpu.dot_dimension_numbers<[1], [0], [0], [1], [0, 0, 1, 1], [], []>} : vector<8x128xbf16>, vector<128x128xbf16>, vector<8x128xf32> -> vector<8x128xf32>
    %c0_3 = arith.constant 0 : index
    %c0_4 = arith.constant 0 : index
    %3 = vector.load %arg3[%c0_3, %c0_4] : memref<1x128xf32, #tpu.memory_space<vmem>>, vector<1x128xf32>
    %4 = vector.broadcast %3 : vector<1x128xf32> to vector<8x128xf32>
    %5 = arith.addf %2, %4 : vector<8x128xf32>
    %cst_5 = arith.constant 0.000000e+00 : f32
    %6 = vector.broadcast %cst_5 : f32 to vector<8x128xf32>
    %7 = arith.maximumf %5, %6 : vector<8x128xf32>
    %8 = arith.truncf %7 : vector<8x128xf32> to vector<8x128xbf16>
    %c0_6 = arith.constant 0 : index
    %c0_7 = arith.constant 0 : index
    %9 = vector.load %arg4[%c0_6, %c0_7] : memref<128x128xbf16, #tpu.memory_space<vmem>>, vector<128x128xbf16>
    %cst_8 = arith.constant dense<0.000000e+00> : vector<8x128xf32>
    %10 = tpu.matmul %8, %9, %cst_8 {dimension_numbers = #tpu.dot_dimension_numbers<[1], [0], [0], [1], [0, 0, 1, 1], [], []>} : vector<8x128xbf16>, vector<128x128xbf16>, vector<8x128xf32> -> vector<8x128xf32>
    %c0_9 = arith.constant 0 : index
    %c0_10 = arith.constant 0 : index
    %11 = vector.load %arg5[%c0_9, %c0_10] : memref<1x128xf32, #tpu.memory_space<vmem>>, vector<1x128xf32>
    %12 = vector.broadcast %11 : vector<1x128xf32> to vector<8x128xf32>
    %13 = arith.addf %10, %12 : vector<8x128xf32>
    %cst_11 = arith.constant 0.000000e+00 : f32
    %14 = vector.broadcast %cst_11 : f32 to vector<8x128xf32>
    %15 = arith.maximumf %13, %14 : vector<8x128xf32>
    %16 = arith.truncf %15 : vector<8x128xf32> to vector<8x128xbf16>
    %c0_12 = arith.constant 0 : index
    %c0_13 = arith.constant 0 : index
    %17 = vector.load %arg6[%c0_12, %c0_13] : memref<128x128xbf16, #tpu.memory_space<vmem>>, vector<128x128xbf16>
    %cst_14 = arith.constant dense<0.000000e+00> : vector<8x128xf32>
    %18 = tpu.matmul %16, %17, %cst_14 {dimension_numbers = #tpu.dot_dimension_numbers<[1], [0], [0], [1], [0, 0, 1, 1], [], []>} : vector<8x128xbf16>, vector<128x128xbf16>, vector<8x128xf32> -> vector<8x128xf32>
    %c0_15 = arith.constant 0 : index
    %c0_16 = arith.constant 0 : index
    %19 = vector.load %arg7[%c0_15, %c0_16] : memref<1x128xf32, #tpu.memory_space<vmem>>, vector<1x128xf32>
    %20 = vector.broadcast %19 : vector<1x128xf32> to vector<8x128xf32>
    %21 = arith.addf %18, %20 : vector<8x128xf32>
    %cst_17 = arith.constant 0.000000e+00 : f32
    %22 = vector.broadcast %cst_17 : f32 to vector<8x128xf32>
    %23 = arith.maximumf %21, %22 : vector<8x128xf32>
    %24 = arith.truncf %23 : vector<8x128xf32> to vector<8x128xbf16>
    %c0_18 = arith.constant 0 : index
    %c0_19 = arith.constant 0 : index
    %25 = vector.load %arg8[%c0_18, %c0_19] : memref<128x128xbf16, #tpu.memory_space<vmem>>, vector<128x128xbf16>
    %cst_20 = arith.constant dense<0.000000e+00> : vector<8x128xf32>
    %26 = tpu.matmul %24, %25, %cst_20 {dimension_numbers = #tpu.dot_dimension_numbers<[1], [0], [0], [1], [0, 0, 1, 1], [], []>} : vector<8x128xbf16>, vector<128x128xbf16>, vector<8x128xf32> -> vector<8x128xf32>
    %c0_21 = arith.constant 0 : index
    %c0_22 = arith.constant 0 : index
    %27 = vector.load %arg9[%c0_21, %c0_22] : memref<1x128xf32, #tpu.memory_space<vmem>>, vector<1x128xf32>
    %28 = vector.broadcast %27 : vector<1x128xf32> to vector<8x128xf32>
    %29 = arith.addf %26, %28 : vector<8x128xf32>
    %cst_23 = arith.constant 0.000000e+00 : f32
    %30 = vector.broadcast %cst_23 : f32 to vector<8x128xf32>
    %31 = arith.maximumf %29, %30 : vector<8x128xf32>
    %c0_24 = arith.constant 0 : index
    %c0_25 = arith.constant 0 : index
    %32 = vector.load %arg10[%c0_24, %c0_25] : memref<8x128xf32, #tpu.memory_space<vmem>>, vector<8x128xf32>
    tpu.vector_store %arg10[%c0_24, %c0_25], %31 {strides = array<i32>} : memref<8x128xf32, #tpu.memory_space<vmem>>, vector<8x128xf32>,
    return
  }
  func.func @transform_0(%arg0: i32) -> (i32, i32) {
    %c0_i32 = arith.constant 0 : i32
    %c0_i32_0 = arith.constant 0 : i32
    return %arg0, %c0_i32 : i32, i32
  }
  func.func @transform_1(%arg0: i32) -> (i32, i32) {
    %c0_i32 = arith.constant 0 : i32
    %c0_i32_0 = arith.constant 0 : i32
    %c0_i32_1 = arith.constant 0 : i32
    return %c0_i32, %c0_i32_0 : i32, i32
  }
  func.func @transform_2(%arg0: i32) -> (i32, i32) {
    %c0_i32 = arith.constant 0 : i32
    %c0_i32_0 = arith.constant 0 : i32
    %c0_i32_1 = arith.constant 0 : i32
    return %c0_i32, %c0_i32_0 : i32, i32
  }
  func.func @transform_3(%arg0: i32) -> (i32, i32) {
    %c0_i32 = arith.constant 0 : i32
    %c0_i32_0 = arith.constant 0 : i32
    %c0_i32_1 = arith.constant 0 : i32
    return %c0_i32, %c0_i32_0 : i32, i32
  }
  func.func @transform_4(%arg0: i32) -> (i32, i32) {
    %c0_i32 = arith.constant 0 : i32
    %c0_i32_0 = arith.constant 0 : i32
    %c0_i32_1 = arith.constant 0 : i32
    return %c0_i32, %c0_i32_0 : i32, i32
  }
  func.func @transform_5(%arg0: i32) -> (i32, i32) {
    %c0_i32 = arith.constant 0 : i32
    %c0_i32_0 = arith.constant 0 : i32
    %c0_i32_1 = arith.constant 0 : i32
    return %c0_i32, %c0_i32_0 : i32, i32
  }
  func.func @transform_6(%arg0: i32) -> (i32, i32) {
    %c0_i32 = arith.constant 0 : i32
    %c0_i32_0 = arith.constant 0 : i32
    %c0_i32_1 = arith.constant 0 : i32
    return %c0_i32, %c0_i32_0 : i32, i32
  }
  func.func @transform_7(%arg0: i32) -> (i32, i32) {
    %c0_i32 = arith.constant 0 : i32
    %c0_i32_0 = arith.constant 0 : i32
    %c0_i32_1 = arith.constant 0 : i32
    return %c0_i32, %c0_i32_0 : i32, i32
  }
  func.func @transform_8(%arg0: i32) -> (i32, i32) {
    %c0_i32 = arith.constant 0 : i32
    %c0_i32_0 = arith.constant 0 : i32
    %c0_i32_1 = arith.constant 0 : i32
    return %c0_i32, %c0_i32_0 : i32, i32
  }
  func.func @transform_9(%arg0: i32) -> (i32, i32) {
    %c0_i32 = arith.constant 0 : i32
    %c0_i32_0 = arith.constant 0 : i32
    return %arg0, %c0_i32 : i32, i32
  }
}

</mosaic_0001>

<llo_original>
// kernel: tpu_custom_call.1
$region0: #{tpu_custom_call.1}
  #allocation0 [shape = 'u32[]', space=smem, size = 0x4, offset = 0x4, fixed_abs, tag = 'smem constant byte address 0x4 - core index']
  #allocation1 [shape = 'u32[72,128]{1,0:T(1,128)}', space=vmem, size = 0x9000, scoped, tag = 'internal scratch']
  %s0 = inlined_call_operand.hbm [shape: bf16[8,128], index: 0, kind: input, shape index: {}]
  %s1 = inlined_call_operand.hbm [shape: bf16[128,128], index: 1, kind: input, shape index: {}]
  %s2 = inlined_call_operand.vmem [shape: f32[1,128], index: 2, kind: input, shape index: {}]
  %s3 = inlined_call_operand.hbm [shape: bf16[128,128], index: 3, kind: input, shape index: {}]
  %s4 = inlined_call_operand.vmem [shape: f32[1,128], index: 4, kind: input, shape index: {}]
  %s5 = inlined_call_operand.hbm [shape: bf16[128,128], index: 5, kind: input, shape index: {}]
  %s6 = inlined_call_operand.vmem [shape: f32[1,128], index: 6, kind: input, shape index: {}]
  %s7 = inlined_call_operand.hbm [shape: bf16[128,128], index: 7, kind: input, shape index: {}]
  %s8 = inlined_call_operand.vmem [shape: f32[1,128], index: 8, kind: input, shape index: {}]
  %s9 = inlined_call_operand.hbm [shape: f32[8,128], index: 9, kind: output, shape index: {}]
  %s10 = sld [smem:[#allocation0]]
  $region66: #{tpu_custom_call.1} parent=0
    _
  %s12 = ssub.s32 1, %s10
  %s13 = scalar_select 0, %s12, %s10
  $region1: #{tpu_custom_call.1} parent=0
    #allocation2 [shape = 'u8[2048]{0}', space=vmem, size = 0x800, scoped, tag = 'input window, operand 0, single buffered']
    #allocation3 [shape = 's32[1]{0}', space=sflag, size = 0x4, scoped, tag = 'scoped memory for tpu_custom_call.1']
    #allocation4 [shape = 's32[1]{0}', space=sflag, size = 0x4, scoped, tag = 'scoped memory for tpu_custom_call.1']
    #allocation5 [shape = 'u8[32768]{0}', space=vmem, size = 0x8000, scoped, tag = 'input window, operand 1, single buffered']
    #allocation6 [shape = 's32[1]{0}', space=sflag, size = 0x4, scoped, tag = 'scoped memory for tpu_custom_call.1']
    #allocation7 [shape = 'u8[32768]{0}', space=vmem, size = 0x8000, scoped, tag = 'input window, operand 3, single buffered']
    #allocation8 [shape = 'u8[32768]{0}', space=vmem, size = 0x8000, scoped, tag = 'input window, operand 5, single buffered']
    #allocation9 [shape = 's32[1]{0}', space=sflag, size = 0x4, scoped, tag = 'scoped memory for tpu_custom_call.1']
    #allocation10 [shape = 'u8[32768]{0}', space=vmem, size = 0x8000, scoped, tag = 'input window, operand 7, single buffered']
    #allocation11 [shape = 'u8[4096]{0}', space=vmem, size = 0x1000, scoped, tag = 'output window, operand 0, single buffered']
    %14 = vsyncpa [#allocation3], 0
    %15 = vsyncpa [#allocation6], 0
    %16 = vsyncpa [#allocation9], 0
    %17 = vsyncpa [#allocation4], 0
    // Predicated region
    $region2: #{tpu_custom_call.1} parent=1 // pred_check
      _
    $region3: #{tpu_custom_call.1} parent=1 // pred_check_branch
      %19 = sbr.rel (0) target = $region5
    $region4: #{tpu_custom_call.1} parent=1 // pred_region
      %21 = vsyncadd [#allocation3], 0
      %s23 = sshll.u32 %s0, 4
      %s24 = int_to_ptr.hbm [resolvable:$true] %s23
      %s25 = sshll.u32 [#allocation2], 4
      %s26 = int_to_ptr.vmem [resolvable:$true] %s25
      %28 = dma.hbm_to_vmem [thread:$0]  %s24, 64, %s26, [#allocation3]
    $region5: #{tpu_custom_call.1} parent=1 // pred_fallthru
      _
    // Predicated region
    $region6: #{tpu_custom_call.1} parent=1 // pred_check
      _
    $region7: #{tpu_custom_call.1} parent=1 // pred_check_branch
      %30 = sbr.rel (0) target = $region9
    $region8: #{tpu_custom_call.1} parent=1 // pred_region
      %32 = vsyncadd [#allocation6], 0
      %s33 = sshll.u32 %s1, 4
      %s34 = int_to_ptr.hbm [resolvable:$true] %s33
      %s35 = sshll.u32 [#allocation5], 4
      %s36 = int_to_ptr.vmem [resolvable:$true] %s35
      %41 = dma.hbm_to_vmem [thread:$0]  %s34, 1024, %s36, [#allocation6], 64, 64, 4
    $region9: #{tpu_custom_call.1} parent=1 // pred_fallthru
      _
    // Predicated region
    $region10: #{tpu_custom_call.1} parent=1 // pred_check
      _
    $region11: #{tpu_custom_call.1} parent=1 // pred_check_branch
      %43 = sbr.rel (0) target = $region13
    $region12: #{tpu_custom_call.1} parent=1 // pred_region
      _
    $region13: #{tpu_custom_call.1} parent=1 // pred_fallthru
      _
    // Predicated region
    $region14: #{tpu_custom_call.1} parent=1 // pred_check
      _
    $region15: #{tpu_custom_call.1} parent=1 // pred_check_branch
      %45 = sbr.rel (0) target = $region17
    $region16: #{tpu_custom_call.1} parent=1 // pred_region
      %47 = vsyncadd [#allocation6], 0
      %s48 = sshll.u32 %s3, 4
      %s49 = int_to_ptr.hbm [resolvable:$true] %s48
      %s50 = sshll.u32 [#allocation7], 4
      %s51 = int_to_ptr.vmem [resolvable:$true] %s50
      %56 = dma.hbm_to_vmem [thread:$0]  %s49, 1024, %s51, [#allocation6], 64, 64, 4
    $region17: #{tpu_custom_call.1} parent=1 // pred_fallthru
      _
    // Predicated region
    $region18: #{tpu_custom_call.1} parent=1 // pred_check
      _
    $region19: #{tpu_custom_call.1} parent=1 // pred_check_branch
      %58 = sbr.rel (0) target = $region21
    $region20: #{tpu_custom_call.1} parent=1 // pred_region
      _
    $region21: #{tpu_custom_call.1} parent=1 // pred_fallthru
      _
    // Predicated region
    $region22: #{tpu_custom_call.1} parent=1 // pred_check
      _
    $region23: #{tpu_custom_call.1} parent=1 // pred_check_branch
      %60 = sbr.rel (0) target = $region25
    $region24: #{tpu_custom_call.1} parent=1 // pred_region
      %62 = vsyncadd [#allocation9], 0
      %s63 = sshll.u32 %s5, 4
      %s64 = int_to_ptr.hbm [resolvable:$true] %s63
      %s65 = sshll.u32 [#allocation8], 4
      %s66 = int_to_ptr.vmem [resolvable:$true] %s65
      %71 = dma.hbm_to_vmem [thread:$0]  %s64, 1024, %s66, [#allocation9], 64, 64, 4
    $region25: #{tpu_custom_call.1} parent=1 // pred_fallthru
      _
    // Predicated region
    $region26: #{tpu_custom_call.1} parent=1 // pred_check
      _
    $region27: #{tpu_custom_call.1} parent=1 // pred_check_branch
      %73 = sbr.rel (0) target = $region29
    $region28: #{tpu_custom_call.1} parent=1 // pred_region
      _
    $region29: #{tpu_custom_call.1} parent=1 // pred_fallthru
      _
    // Predicated region
    $region30: #{tpu_custom_call.1} parent=1 // pred_check
      _
    $region31: #{tpu_custom_call.1} parent=1 // pred_check_branch
      %75 = sbr.rel (0) target = $region33
    $region32: #{tpu_custom_call.1} parent=1 // pred_region
      %77 = vsyncadd [#allocation9], 0
      %s78 = sshll.u32 %s7, 4
      %s79 = int_to_ptr.hbm [resolvable:$true] %s78
      %s80 = sshll.u32 [#allocation10], 4
      %s81 = int_to_ptr.vmem [resolvable:$true] %s80
      %86 = dma.hbm_to_vmem [thread:$0]  %s79, 1024, %s81, [#allocation9], 64, 64, 4
    $region33: #{tpu_custom_call.1} parent=1 // pred_fallthru
      _
    // Predicated region
    $region34: #{tpu_custom_call.1} parent=1 // pred_check
      _
    $region35: #{tpu_custom_call.1} parent=1 // pred_check_branch
      %88 = sbr.rel (0) target = $region37
    $region36: #{tpu_custom_call.1} parent=1 // pred_region
      _
    $region37: #{tpu_custom_call.1} parent=1 // pred_fallthru
      _
    // Predicated region
    $region38: #{tpu_custom_call.1} parent=1 // pred_check
      _
    $region39: #{tpu_custom_call.1} parent=1 // pred_check_branch
      %90 = sbr.rel (0) target = $region41
    $region40: #{tpu_custom_call.1} parent=1 // pred_region
      %92 = dma.done [#allocation3], 64
    $region41: #{tpu_custom_call.1} parent=1 // pred_fallthru
      _
    // Predicated region
    $region42: #{tpu_custom_call.1} parent=1 // pred_check
      _
    $region43: #{tpu_custom_call.1} parent=1 // pred_check_branch
      %94 = sbr.rel (0) target = $region45
    $region44: #{tpu_custom_call.1} parent=1 // pred_region
      %96 = dma.done [#allocation6], 1024
    $region45: #{tpu_custom_call.1} parent=1 // pred_fallthru
      _
    // Predicated region
    $region46: #{tpu_custom_call.1} parent=1 // pred_check
      _
    $region47: #{tpu_custom_call.1} parent=1 // pred_check_branch
      %98 = sbr.rel (0) target = $region49
    $region48: #{tpu_custom_call.1} parent=1 // pred_region
      %100 = dma.done [#allocation6], 1024
    $region49: #{tpu_custom_call.1} parent=1 // pred_fallthru
      _
    // Predicated region
    $region50: #{tpu_custom_call.1} parent=1 // pred_check
      _
    $region51: #{tpu_custom_call.1} parent=1 // pred_check_branch
      %102 = sbr.rel (0) target = $region53
    $region52: #{tpu_custom_call.1} parent=1 // pred_region
      %104 = dma.done [#allocation9], 1024
    $region53: #{tpu_custom_call.1} parent=1 // pred_fallthru
      _
    // Predicated region
    $region54: #{tpu_custom_call.1} parent=1 // pred_check
      _
    $region55: #{tpu_custom_call.1} parent=1 // pred_check_branch
      %106 = sbr.rel (0) target = $region57
    $region56: #{tpu_custom_call.1} parent=1 // pred_region
      %108 = dma.done [#allocation9], 1024
    $region57: #{tpu_custom_call.1} parent=1 // pred_fallthru
      _
    %v109 = vld [vmem:[#allocation2] sm:$0xf]
    %v110 = vld [vmem:[#allocation5] sm:$0xf]
    %v111 = vld [vmem:[#allocation5 + $0x4] sm:$0xf]
    %v112 = vld [vmem:[#allocation5 + $0x8] sm:$0xf]
    %v113 = vld [vmem:[#allocation5 + $0xc] sm:$0xf]
    %v114 = vld [vmem:[#allocation5 + $0x10] sm:$0xf]
    %v115 = vld [vmem:[#allocation5 + $0x14] sm:$0xf]
    %v116 = vld [vmem:[#allocation5 + $0x18] sm:$0xf]
    %v117 = vld [vmem:[#allocation5 + $0x1c] sm:$0xf]
    %v118 = vld [vmem:[#allocation5 + $0x20] sm:$0xf]
    %v119 = vld [vmem:[#allocation5 + $0x24] sm:$0xf]
    %v120 = vld [vmem:[#allocation5 + $0x28] sm:$0xf]
    %v121 = vld [vmem:[#allocation5 + $0x2c] sm:$0xf]
    %v122 = vld [vmem:[#allocation5 + $0x30] sm:$0xf]
    %v123 = vld [vmem:[#allocation5 + $0x34] sm:$0xf]
    %v124 = vld [vmem:[#allocation5 + $0x38] sm:$0xf]
    %v125 = vld [vmem:[#allocation5 + $0x3c] sm:$0xf]
    %v126 = vld [vmem:[%s2] sm:$0x1]
    %v128 = vperm.slane %v126, 0
    %v146 = vunpack.c.l.b16 %v110
    %v147 = vunpack.c.l.b16 %v111
    %v148 = vunpack.c.l.b16 %v112
    %v149 = vunpack.c.l.b16 %v113
    %v150 = vunpack.c.l.b16 %v114
    %v151 = vunpack.c.l.b16 %v115
    %v152 = vunpack.c.l.b16 %v116
    %v153 = vunpack.c.l.b16 %v117
    %v154 = vunpack.c.l.b16 %v118
    %v155 = vunpack.c.l.b16 %v119
    %v156 = vunpack.c.l.b16 %v120
    %v157 = vunpack.c.l.b16 %v121
    %v158 = vunpack.c.l.b16 %v122
    %v159 = vunpack.c.l.b16 %v123
    %v160 = vunpack.c.l.b16 %v124
    %v161 = vunpack.c.l.b16 %v125
    %v162 = vpack.c.b16 %v147, %v146
    %v163 = vpack.c.b16 %v149, %v148
    %v164 = vpack.c.b16 %v151, %v150
    %v165 = vpack.c.b16 %v153, %v152
    %v166 = vpack.c.b16 %v155, %v154
    %v167 = vpack.c.b16 %v157, %v156
    %v168 = vpack.c.b16 %v159, %v158
    %v169 = vpack.c.b16 %v161, %v160
    %178 = vmatpush.bf16.msra.mxu0 %v169
    %179 = vmatpush.bf16.msra.mxu0 %v168
    %180 = vmatpush.bf16.msra.mxu0 %v167
    %181 = vmatpush.bf16.msra.mxu0 %v166
    %182 = vmatpush.bf16.msra.mxu0 %v165
    %183 = vmatpush.bf16.msra.mxu0 %v164
    %184 = vmatpush.bf16.msra.mxu0 %v163
    %185 = vmatpush.bf16.msra.mxu0 %v162
    %186 = vmatmul.bf16.gmra.mxu0 %v109
    %v187 = vpop.f32.mrf.mxu0
    %v188 = vadd.f32 %v128, %v187
    %v189 = vpop.f32.mrf.mxu0
    %190 = vdwg.mxu0
    %v191 = vmax.f32 %v188, 0.0
    %v192 = vpack.c.bf16 %v191, %v191
    %v193 = vld [vmem:[#allocation7] sm:$0xf]
    %v194 = vld [vmem:[#allocation7 + $0x4] sm:$0xf]
    %v195 = vld [vmem:[#allocation7 + $0x8] sm:$0xf]
    %v196 = vld [vmem:[#allocation7 + $0xc] sm:$0xf]
    %v197 = vld [vmem:[#allocation7 + $0x10] sm:$0xf]
    %v198 = vld [vmem:[#allocation7 + $0x14] sm:$0xf]
    %v199 = vld [vmem:[#allocation7 + $0x18] sm:$0xf]
    %v200 = vld [vmem:[#allocation7 + $0x1c] sm:$0xf]
    %v201 = vld [vmem:[#allocation7 + $0x20] sm:$0xf]
    %v202 = vld [vmem:[#allocation7 + $0x24] sm:$0xf]
    %v203 = vld [vmem:[#allocation7 + $0x28] sm:$0xf]
    %v204 = vld [vmem:[#allocation7 + $0x2c] sm:$0xf]
    %v205 = vld [vmem:[#allocation7 + $0x30] sm:$0xf]
    %v206 = vld [vmem:[#allocation7 + $0x34] sm:$0xf]
    %v207 = vld [vmem:[#allocation7 + $0x38] sm:$0xf]
    %v208 = vld [vmem:[#allocation7 + $0x3c] sm:$0xf]
    %v209 = vld [vmem:[%s4] sm:$0x1]
    %v211 = vperm.slane %v209, 0
    %v229 = vunpack.c.l.b16 %v193
    %v230 = vunpack.c.l.b16 %v194
    %v231 = vunpack.c.l.b16 %v195
    %v232 = vunpack.c.l.b16 %v196
    %v233 = vunpack.c.l.b16 %v197
    %v234 = vunpack.c.l.b16 %v198
    %v235 = vunpack.c.l.b16 %v199
    %v236 = vunpack.c.l.b16 %v200
    %v237 = vunpack.c.l.b16 %v201
    %v238 = vunpack.c.l.b16 %v202
    %v239 = vunpack.c.l.b16 %v203
    %v240 = vunpack.c.l.b16 %v204
    %v241 = vunpack.c.l.b16 %v205
    %v242 = vunpack.c.l.b16 %v206
    %v243 = vunpack.c.l.b16 %v207
    %v244 = vunpack.c.l.b16 %v208
    %v245 = vpack.c.b16 %v230, %v229
    %v246 = vpack.c.b16 %v232, %v231
    %v247 = vpack.c.b16 %v234, %v233
    %v248 = vpack.c.b16 %v236, %v235
    %v249 = vpack.c.b16 %v238, %v237
    %v250 = vpack.c.b16 %v240, %v239
    %v251 = vpack.c.b16 %v242, %v241
    %v252 = vpack.c.b16 %v244, %v243
    %261 = vmatpush.bf16.msra.mxu0 %v252
    %262 = vmatpush.bf16.msra.mxu0 %v251
    %263 = vmatpush.bf16.msra.mxu0 %v250
    %264 = vmatpush.bf16.msra.mxu0 %v249
    %265 = vmatpush.bf16.msra.mxu0 %v248
    %266 = vmatpush.bf16.msra.mxu0 %v247
    %267 = vmatpush.bf16.msra.mxu0 %v246
    %268 = vmatpush.bf16.msra.mxu0 %v245
    %269 = vmatmul.bf16.gmra.mxu0 %v192
    %v270 = vpop.f32.mrf.mxu0
    %v271 = vadd.f32 %v211, %v270
    %v272 = vpop.f32.mrf.mxu0
    %273 = vdwg.mxu0
    %v274 = vmax.f32 %v271, 0.0
    %v275 = vpack.c.bf16 %v274, %v274
    %v276 = vld [vmem:[#allocation8] sm:$0xf]
    %v277 = vld [vmem:[#allocation8 + $0x4] sm:$0xf]
    %v278 = vld [vmem:[#allocation8 + $0x8] sm:$0xf]
    %v279 = vld [vmem:[#allocation8 + $0xc] sm:$0xf]
    %v280 = vld [vmem:[#allocation8 + $0x10] sm:$0xf]
    %v281 = vld [vmem:[#allocation8 + $0x14] sm:$0xf]
    %v282 = vld [vmem:[#allocation8 + $0x18] sm:$0xf]
    %v283 = vld [vmem:[#allocation8 + $0x1c] sm:$0xf]
    %v284 = vld [vmem:[#allocation8 + $0x20] sm:$0xf]
    %v285 = vld [vmem:[#allocation8 + $0x24] sm:$0xf]
    %v286 = vld [vmem:[#allocation8 + $0x28] sm:$0xf]
    %v287 = vld [vmem:[#allocation8 + $0x2c] sm:$0xf]
    %v288 = vld [vmem:[#allocation8 + $0x30] sm:$0xf]
    %v289 = vld [vmem:[#allocation8 + $0x34] sm:$0xf]
    %v290 = vld [vmem:[#allocation8 + $0x38] sm:$0xf]
    %v291 = vld [vmem:[#allocation8 + $0x3c] sm:$0xf]
    %v292 = vld [vmem:[%s6] sm:$0x1]
    %v294 = vperm.slane %v292, 0
    %v312 = vunpack.c.l.b16 %v276
    %v313 = vunpack.c.l.b16 %v277
    %v314 = vunpack.c.l.b16 %v278
    %v315 = vunpack.c.l.b16 %v279
    %v316 = vunpack.c.l.b16 %v280
    %v317 = vunpack.c.l.b16 %v281
    %v318 = vunpack.c.l.b16 %v282
    %v319 = vunpack.c.l.b16 %v283
    %v320 = vunpack.c.l.b16 %v284
    %v321 = vunpack.c.l.b16 %v285
    %v322 = vunpack.c.l.b16 %v286
    %v323 = vunpack.c.l.b16 %v287
    %v324 = vunpack.c.l.b16 %v288
    %v325 = vunpack.c.l.b16 %v289
    %v326 = vunpack.c.l.b16 %v290
    %v327 = vunpack.c.l.b16 %v291
    %v328 = vpack.c.b16 %v313, %v312
    %v329 = vpack.c.b16 %v315, %v314
    %v330 = vpack.c.b16 %v317, %v316
    %v331 = vpack.c.b16 %v319, %v318
    %v332 = vpack.c.b16 %v321, %v320
    %v333 = vpack.c.b16 %v323, %v322
    %v334 = vpack.c.b16 %v325, %v324
    %v335 = vpack.c.b16 %v327, %v326
    %344 = vmatpush.bf16.msra.mxu0 %v335
    %345 = vmatpush.bf16.msra.mxu0 %v334
    %346 = vmatpush.bf16.msra.mxu0 %v333
    %347 = vmatpush.bf16.msra.mxu0 %v332
    %348 = vmatpush.bf16.msra.mxu0 %v331
    %349 = vmatpush.bf16.msra.mxu0 %v330
    %350 = vmatpush.bf16.msra.mxu0 %v329
    %351 = vmatpush.bf16.msra.mxu0 %v328
    %352 = vmatmul.bf16.gmra.mxu0 %v275
    %v353 = vpop.f32.mrf.mxu0
    %v354 = vadd.f32 %v294, %v353
    %v355 = vpop.f32.mrf.mxu0
    %356 = vdwg.mxu0
    %v357 = vmax.f32 %v354, 0.0
    %v358 = vpack.c.bf16 %v357, %v357
    %v359 = vld [vmem:[#allocation10] sm:$0xf]
    %v360 = vld [vmem:[#allocation10 + $0x4] sm:$0xf]
    %v361 = vld [vmem:[#allocation10 + $0x8] sm:$0xf]
    %v362 = vld [vmem:[#allocation10 + $0xc] sm:$0xf]
    %v363 = vld [vmem:[#allocation10 + $0x10] sm:$0xf]
    %v364 = vld [vmem:[#allocation10 + $0x14] sm:$0xf]
    %v365 = vld [vmem:[#allocation10 + $0x18] sm:$0xf]
    %v366 = vld [vmem:[#allocation10 + $0x1c] sm:$0xf]
    %v367 = vld [vmem:[#allocation10 + $0x20] sm:$0xf]
    %v368 = vld [vmem:[#allocation10 + $0x24] sm:$0xf]
    %v369 = vld [vmem:[#allocation10 + $0x28] sm:$0xf]
    %v370 = vld [vmem:[#allocation10 + $0x2c] sm:$0xf]
    %v371 = vld [vmem:[#allocation10 + $0x30] sm:$0xf]
    %v372 = vld [vmem:[#allocation10 + $0x34] sm:$0xf]
    %v373 = vld [vmem:[#allocation10 + $0x38] sm:$0xf]
    %v374 = vld [vmem:[#allocation10 + $0x3c] sm:$0xf]
    %v375 = vld [vmem:[%s8] sm:$0x1]
    %v377 = vperm.slane %v375, 0
    %v395 = vunpack.c.l.b16 %v359
    %v396 = vunpack.c.l.b16 %v360
    %v397 = vunpack.c.l.b16 %v361
    %v398 = vunpack.c.l.b16 %v362
    %v399 = vunpack.c.l.b16 %v363
    %v400 = vunpack.c.l.b16 %v364
    %v401 = vunpack.c.l.b16 %v365
    %v402 = vunpack.c.l.b16 %v366
    %v403 = vunpack.c.l.b16 %v367
    %v404 = vunpack.c.l.b16 %v368
    %v405 = vunpack.c.l.b16 %v369
    %v406 = vunpack.c.l.b16 %v370
    %v407 = vunpack.c.l.b16 %v371
    %v408 = vunpack.c.l.b16 %v372
    %v409 = vunpack.c.l.b16 %v373
    %v410 = vunpack.c.l.b16 %v374
    %v411 = vpack.c.b16 %v396, %v395
    %v412 = vpack.c.b16 %v398, %v397
    %v413 = vpack.c.b16 %v400, %v399
    %v414 = vpack.c.b16 %v402, %v401
    %v415 = vpack.c.b16 %v404, %v403
    %v416 = vpack.c.b16 %v406, %v405
    %v417 = vpack.c.b16 %v408, %v407
    %v418 = vpack.c.b16 %v410, %v409
    %427 = vmatpush.bf16.msra.mxu0 %v418
    %428 = vmatpush.bf16.msra.mxu0 %v417
    %429 = vmatpush.bf16.msra.mxu0 %v416
    %430 = vmatpush.bf16.msra.mxu0 %v415
    %431 = vmatpush.bf16.msra.mxu0 %v414
    %432 = vmatpush.bf16.msra.mxu0 %v413
    %433 = vmatpush.bf16.msra.mxu0 %v412
    %434 = vmatpush.bf16.msra.mxu0 %v411
    %435 = vmatmul.bf16.gmra.mxu0 %v358
    %v436 = vpop.f32.mrf.mxu0
    %v437 = vadd.f32 %v377, %v436
    %v438 = vpop.f32.mrf.mxu0
    %439 = vdwg.mxu0
    %v440 = vmax.f32 %v437, 0.0
    %441 = vst [vmem:[#allocation11] sm:$0xff] %v440
    // Predicated region
    $region58: #{tpu_custom_call.1} parent=1 // pred_check
      _
    $region59: #{tpu_custom_call.1} parent=1 // pred_check_branch
      %443 = sbr.rel (0) target = $region61
    $region60: #{tpu_custom_call.1} parent=1 // pred_region
      %445 = vsyncadd [#allocation4], 0
      %s447 = sshll.u32 [#allocation11], 4
      %s448 = int_to_ptr.vmem [resolvable:$true] %s447
      %s449 = sshll.u32 %s9, 4
      %s450 = int_to_ptr.hbm [resolvable:$true] %s449
      %452 = dma.vmem_to_hbm [thread:$0]  %s448, 128, %s450, [#allocation4]
    $region61: #{tpu_custom_call.1} parent=1 // pred_fallthru
      _
    // Predicated region
    $region62: #{tpu_custom_call.1} parent=1 // pred_check
      _
    $region63: #{tpu_custom_call.1} parent=1 // pred_check_branch
      %454 = sbr.rel (0) target = $region65
    $region64: #{tpu_custom_call.1} parent=1 // pred_region
      %456 = dma.done [#allocation4], 128
    $region65: #{tpu_custom_call.1} parent=1 // pred_fallthru
      _
    %457 = vsyncpa [#allocation3], 1
    %458 = vsyncpa [#allocation6], 1
    %459 = vsyncpa [#allocation9], 1
    %460 = vsyncpa [#allocation4], 1

</llo_original>
